<compile_context>
chip_gen: v6e
topology: v6e:2x2x1
jax: 0.10.0
libtpu: 0.0.40
codegen_flags: <defaults>
</compile_context>

<pallas_src>
import functools

import jax
import jax.numpy as jnp
from jax.experimental import pallas as pl
from jax.experimental.pallas import tpu as pltpu

_LANE = 128                              # lane width (last dim)
_BATCH_TILE = 128                        # batch tile for the large-batch grid path
_VMEM_GUARD_BYTES = 24 * 1024 * 1024     # stay well below v7x's 64 MiB physical VMEM
_VMEM_RAISE_LIMIT_BYTES = 8 * 1024 * 1024


def _round_up(n: int, m: int) -> int:
    return ((n + m - 1) // m) * m


def _apply_activation(y, activation: str):
    if activation == "tanh":
        return jnp.tanh(y)
    if activation == "relu":
        return jnp.maximum(y, 0.0)
    if activation == "none":
        return y
    raise ValueError(f"unsupported activation: {activation}")


def _fused_mlp_kernel(*refs, num_layers: int, has_bias: bool, activation: str):
    """refs = (x, w_0..w_{L-1}, [b_0..b_{L-1}], out).

    x:[bm, In] (compute dtype), w_0:[In, H0p], w_i:[H(i-1)p, Hip],
    w_{L-1}:[H(L-2)p, Out], b_i:[1, width_i] (f32), out:[bm, Out] (f32).
    The whole matmul -> (+bias) -> activation chain stays in VMEM/vregs.
    """
    x_ref = refs[0]
    w_refs = refs[1:1 + num_layers]
    b_refs = refs[1 + num_layers:1 + 2 * num_layers] if has_bias else ()
    o_ref = refs[-1]

    compute_dtype = w_refs[0].dtype      # bf16 (default) or f32
    h = x_ref[...]                       # already compute dtype (cast in wrapper)
    for i in range(num_layers):
        # MXU matmul, f32 accumulation.
        y = jnp.dot(h, w_refs[i][...], preferred_element_type=jnp.float32)
        if has_bias:
            y = y + b_refs[i][...]       # f32 bias row, broadcast over batch
        if i < num_layers - 1:
            # Activation in f32 (safe on v5e: no bf16 VPU/EUP there).
            y = _apply_activation(y, activation)
            h = y.astype(compute_dtype)
        else:
            h = y                        # output layer: no activation
    o_ref[...] = h.astype(o_ref.dtype)


def _mlp_forward(x, weights, biases, *, activation: str):
    """x:[B, In] at logical shape; weights/biases pre-padded on hidden dims."""
    B, in_features = x.shape
    num_layers = len(weights)
    has_bias = len(biases) > 0
    out_features = weights[-1].shape[1]
    compute_dtype = weights[0].dtype

    # Cast (no pad): the kernel consumes x at its logical shape via a
    # full-array BlockSpec, so the only wrapper-side op is this tiny cast.
    x = x.astype(compute_dtype)

    use_batch_grid = (B >= 2 * _BATCH_TILE) and (B % _BATCH_TILE == 0)
    bm = _BATCH_TILE if use_batch_grid else B

    # ---- VMEM scaling guard (all-weights-resident design) -------------------
    max_width = max([w.shape[1] for w in weights] + [in_features])
    resident_bytes = (
        sum(w.size * w.dtype.itemsize for w in weights)
        + sum(b.size * b.dtype.itemsize for b in biases)
        + 2 * bm * in_features * x.dtype.itemsize        # double-buffered x block
        + 2 * bm * out_features * 4                      # double-buffered out block
        + 2 * bm * max_width * 4                         # live f32 activations
    )
    if resident_bytes > _VMEM_GUARD_BYTES:
        # TODO(synk): for hidden dims this large, switch to a layer-tiled grid
        # (per-layer K/N tiles, reduction axis "arbitrary") so weight DMA is
        # pipelined against compute instead of being fully VMEM-resident.
        raise NotImplementedError(
            f"fused-MLP working set {resident_bytes} B exceeds the all-resident "
            f"VMEM budget {_VMEM_GUARD_BYTES} B")
    vmem_limit = (2 * _VMEM_GUARD_BYTES
                  if resident_bytes > _VMEM_RAISE_LIMIT_BYTES else None)

    kernel = functools.partial(
        _fused_mlp_kernel,
        num_layers=num_layers,
        has_bias=has_bias,
        activation=activation,
    )

    if use_batch_grid:
        # Batch-tiled grid: shards across both TensorCores on v7x; weights keep
        # a constant block index so they stay resident (no per-step re-DMA).
        grid = (B // _BATCH_TILE,)
        in_specs = [pl.BlockSpec((bm, in_features), lambda i: (i, 0))]
        in_specs += [pl.BlockSpec(tuple(w.shape), lambda i: (0, 0)) for w in weights]
        in_specs += [pl.BlockSpec(tuple(b.shape), lambda i: (0, 0)) for b in biases]
        out_spec = pl.BlockSpec((bm, out_features), lambda i: (i, 0))
        dim_sem = ("parallel",)
    else:
        # Single-shot: whole working set fits easily in VMEM; any grid would
        # only add per-step overhead at these sizes.
        grid = ()
        in_specs = [pl.BlockSpec((B, in_features), lambda: (0, 0))]
        in_specs += [pl.BlockSpec(tuple(w.shape), lambda: (0, 0)) for w in weights]
        in_specs += [pl.BlockSpec(tuple(b.shape), lambda: (0, 0)) for b in biases]
        out_spec = pl.BlockSpec((B, out_features), lambda: (0, 0))
        dim_sem = None

    # Advisory cost estimate for XLA's scheduler.
    flops = 2 * B * sum(w.shape[0] * w.shape[1] for w in weights)
    transcendentals = (B * sum(w.shape[1] for w in weights[:-1])
                       if activation == "tanh" else 0)
    bytes_accessed = (
        x.size * x.dtype.itemsize
        + sum(w.size * w.dtype.itemsize for w in weights)
        + sum(b.size * b.dtype.itemsize for b in biases)
        + B * out_features * 4
    )

    return pl.pallas_call(
        kernel,
        out_shape=jax.ShapeDtypeStruct((B, out_features), jnp.float32),
        grid_spec=pltpu.PrefetchScalarGridSpec(
            num_scalar_prefetch=0,
            grid=grid,
            in_specs=in_specs,
            out_specs=out_spec,
        ),
        compiler_params=pltpu.CompilerParams(
            dimension_semantics=dim_sem,
            vmem_limit_bytes=vmem_limit,
        ),
        cost_estimate=pl.CostEstimate(
            flops=flops,
            transcendentals=transcendentals,
            bytes_accessed=bytes_accessed,
        ),
    )(x, *weights, *biases)


class PallasMLP:
    """Mirror of the PyTorch `NN` module (forward semantics).

    Weights stored as [in, out] (transposed vs PyTorch's [out, in]).  Hidden
    widths are zero-padded to 128 lanes; the first layer's input dim and the
    last layer's output dim stay at logical size so the kernel consumes x and
    produces the result at their logical shapes (no wrapper pad/slice HLOs).
    Zero padding is exact through matmul/bias/tanh/relu.
    """

    def __init__(self, nb_of_state_variables, nb_of_output_values,
                 activation: str, hidden_dims, key, add_biases: bool = False,
                 weight_dtype=jnp.bfloat16):
        self.activation = activation
        self.add_biases = add_biases
        self.nb_of_output_values = nb_of_output_values
        self.dims = [nb_of_state_variables] + list(hidden_dims) + [nb_of_output_values]
        num_layers = len(self.dims) - 1

        self.weights = []
        self.biases = []
        for i in range(num_layers):
            key, wk, bk = jax.random.split(key, 3)
            d_in, d_out = self.dims[i], self.dims[i + 1]
            in_dim = d_in if i == 0 else _round_up(d_in, _LANE)
            out_dim = d_out if i == num_layers - 1 else _round_up(d_out, _LANE)
            bound = 1.0 / float(d_in) ** 0.5         # nn.Linear default init range
            w = jax.random.uniform(wk, (d_in, d_out), dtype=jnp.float32,
                                   minval=-bound, maxval=bound)
            w_p = jnp.zeros((in_dim, out_dim), jnp.float32).at[:d_in, :d_out].set(w)
            self.weights.append(w_p.astype(weight_dtype))
            if add_biases:
                b = jax.random.uniform(bk, (d_out,), dtype=jnp.float32,
                                       minval=-bound, maxval=bound)
                b_p = jnp.zeros((1, out_dim), jnp.float32).at[0, :d_out].set(b)
                self.biases.append(b_p)              # biases stay f32 (added to f32 acc)

        self._forward = jax.jit(functools.partial(_mlp_forward, activation=activation))

    def __call__(self, state):
        return self._forward(state, tuple(self.weights), tuple(self.biases))


def _reference_forward(x, model: PallasMLP):
    """Plain-JAX reference mirroring the kernel's dtype handling exactly."""
    cd = model.weights[0].dtype
    h = x.astype(cd).astype(jnp.float32)
    n = len(model.weights)
    for i in range(n):
        y = h @ model.weights[i].astype(jnp.float32)
        if model.add_biases:
            y = y + model.biases[i]
        if i < n - 1:
            y = _apply_activation(y, model.activation)
            h = y.astype(cd).astype(jnp.float32)
        else:
            h = y
    return h


if __name__ == "__main__":
    key = jax.random.PRNGKey(0)
    key, xkey = jax.random.split(key)

    batch = 4
    nb_of_state_variables = 32
    hidden_dims = (64, 48)
    nb_of_output_values = 8

    state = jax.random.normal(xkey, (batch, nb_of_state_variables), dtype=jnp.float32)

    # 1) Default bf16 weights (MXU-native on v5e/v6e/v7x), f32 accumulation + f32 tanh.
    key, k1 = jax.random.split(key)
    model_bf16 = PallasMLP(nb_of_state_variables, nb_of_output_values,
                           activation="tanh", hidden_dims=hidden_dims, key=k1)
    out = model_bf16(state)
    jax.block_until_ready(out)
    ref = _reference_forward(state, model_bf16)
    assert out.shape == (batch, nb_of_output_values)
    assert jnp.allclose(out, ref, atol=2e-2, rtol=2e-2)

    # 2) f32-weight path (default MXU precision; tighter tolerance).
    key, k2 = jax.random.split(key)
    model_f32 = PallasMLP(nb_of_state_variables, nb_of_output_values,
                          activation="tanh", hidden_dims=hidden_dims, key=k2,
                          weight_dtype=jnp.float32)
    out_f32 = model_f32(state)
    jax.block_until_ready(out_f32)
    ref_f32 = _reference_forward(state, model_f32)
    assert out_f32.shape == (batch, nb_of_output_values)
    assert jnp.allclose(out_f32, ref_f32, atol=1e-4, rtol=1e-4)

    # 3) add_biases=True + relu activation (bf16 weights).
    key, k3 = jax.random.split(key)
    model_bias = PallasMLP(nb_of_state_variables, nb_of_output_values,
                           activation="relu", hidden_dims=hidden_dims, key=k3,
                           add_biases=True)
    out_bias = model_bias(state)
    jax.block_until_ready(out_bias)
    ref_bias = _reference_forward(state, model_bias)
    assert out_bias.shape == (batch, nb_of_output_values)
    assert jnp.allclose(out_bias, ref_bias, atol=2e-2, rtol=2e-2)

    # 4) Large batch -> batch-tiled grid with dimension_semantics=("parallel",)
    #    (engages both TensorCores on v7x; weights stay VMEM-resident).
    key, xkey2 = jax.random.split(key)
    big_state = jax.random.normal(xkey2, (256, nb_of_state_variables), dtype=jnp.float32)
    out_big = model_bf16(big_state)
    jax.block_until_ready(out_big)
    ref_big = _reference_forward(big_state, model_bf16)
    assert out_big.shape == (256, nb_of_output_values)
    assert jnp.allclose(out_big, ref_big, atol=2e-2, rtol=2e-2)

    print("KERNEL_OK")
</pallas_src>

<mosaic_0001>
module attributes {stable_mosaic.version = 11 : i64} {
  func.func @_fused_mlp_kernel(%arg0: memref<4x32xbf16, #tpu.memory_space<vmem>>, %arg1: memref<32x128xbf16, #tpu.memory_space<vmem>>, %arg2: memref<128x128xbf16, #tpu.memory_space<vmem>>, %arg3: memref<128x8xbf16, #tpu.memory_space<vmem>>, %arg4: memref<4x8xf32, #tpu.memory_space<vmem>>) attributes {dimension_semantics = [], scalar_prefetch = 0 : i64, scratch_operands = 0 : i64, tpu.core_type = #tpu.core_type<tc>} {
    %c0 = arith.constant 0 : index
    %c0_0 = arith.constant 0 : index
    %0 = vector.load %arg0[%c0, %c0_0] : memref<4x32xbf16, #tpu.memory_space<vmem>>, vector<4x32xbf16>
    %c0_1 = arith.constant 0 : index
    %c0_2 = arith.constant 0 : index
    %1 = vector.load %arg1[%c0_1, %c0_2] : memref<32x128xbf16, #tpu.memory_space<vmem>>, vector<32x128xbf16>
    %cst = arith.constant dense<0.000000e+00> : vector<4x128xf32>
    %2 = tpu.matmul %0, %1, %cst {dimension_numbers = #tpu.dot_dimension_numbers<[1], [0], [0], [1], [0, 0, 1, 1], [], []>} : vector<4x32xbf16>, vector<32x128xbf16>, vector<4x128xf32> -> vector<4x128xf32>
    %3 = math.tanh %2 : vector<4x128xf32>
    %4 = arith.truncf %3 : vector<4x128xf32> to vector<4x128xbf16>
    %c0_3 = arith.constant 0 : index
    %c0_4 = arith.constant 0 : index
    %5 = vector.load %arg2[%c0_3, %c0_4] : memref<128x128xbf16, #tpu.memory_space<vmem>>, vector<128x128xbf16>
    %cst_5 = arith.constant dense<0.000000e+00> : vector<4x128xf32>
    %6 = tpu.matmul %4, %5, %cst_5 {dimension_numbers = #tpu.dot_dimension_numbers<[1], [0], [0], [1], [0, 0, 1, 1], [], []>} : vector<4x128xbf16>, vector<128x128xbf16>, vector<4x128xf32> -> vector<4x128xf32>
    %7 = math.tanh %6 : vector<4x128xf32>
    %8 = arith.truncf %7 : vector<4x128xf32> to vector<4x128xbf16>
    %c0_6 = arith.constant 0 : index
    %c0_7 = arith.constant 0 : index
    %9 = vector.load %arg3[%c0_6, %c0_7] : memref<128x8xbf16, #tpu.memory_space<vmem>>, vector<128x8xbf16>
    %cst_8 = arith.constant dense<0.000000e+00> : vector<4x8xf32>
    %10 = tpu.matmul %8, %9, %cst_8 {dimension_numbers = #tpu.dot_dimension_numbers<[1], [0], [0], [1], [0, 0, 1, 1], [], []>} : vector<4x128xbf16>, vector<128x8xbf16>, vector<4x8xf32> -> vector<4x8xf32>
    %c0_9 = arith.constant 0 : index
    %c0_10 = arith.constant 0 : index
    %11 = vector.load %arg4[%c0_9, %c0_10] : memref<4x8xf32, #tpu.memory_space<vmem>>, vector<4x8xf32>
    tpu.vector_store %arg4[%c0_9, %c0_10], %10 {strides = array<i32>} : memref<4x8xf32, #tpu.memory_space<vmem>>, vector<4x8xf32>,
    return
  }
}

</mosaic_0001>

<llo_original>
// kernel: _mlp_forward.1
$region0: #{_mlp_forward.1}
  #allocation0 [shape = 'u32[]', space=smem, size = 0x4, offset = 0x4, fixed_abs, tag = 'smem constant byte address 0x4 - core index']
  #allocation1 [shape = 'u32[144,128]{1,0:T(1,128)}', space=vmem, size = 0x12000, scoped, tag = 'internal scratch']
  %s0 = inlined_call_operand.vmem [shape: bf16[4,32], index: 0, kind: input, shape index: {}]
  %s1 = inlined_call_operand.hbm [shape: bf16[32,128], index: 1, kind: input, shape index: {}]
  %s2 = inlined_call_operand.vmem [shape: bf16[128,128], index: 2, kind: input, shape index: {}]
  %s3 = inlined_call_operand.vmem [shape: bf16[128,8], index: 3, kind: input, shape index: {}]
  %s4 = inlined_call_operand.hbm [shape: f32[4,8], index: 4, kind: output, shape index: {}]
  %s5 = sld [smem:[#allocation0]]
  $region30: #{_mlp_forward.1} parent=0
    _
  %s7 = ssub.s32 1, %s5
  %s8 = scalar_select 0, %s7, %s5
  $region1: #{_mlp_forward.1} parent=0
    #allocation2 [shape = 'u8[8192]{0}', space=vmem, size = 0x2000, scoped, tag = 'input window, operand 1, single buffered']
    #allocation3 [shape = 's32[1]{0}', space=sflag, size = 0x4, scoped, tag = 'scoped memory for _mlp_forward.1']
    #allocation4 [shape = 's32[1]{0}', space=sflag, size = 0x4, scoped, tag = 'scoped memory for _mlp_forward.1']
    #allocation5 [shape = 'u8[2048]{0}', space=vmem, size = 0x800, scoped, tag = 'output window, operand 0, single buffered']
    %9 = vsyncpa [#allocation3], 0
    %10 = vsyncpa [#allocation4], 0
    // Predicated region
    $region2: #{_mlp_forward.1} parent=1 // pred_check
      _
    $region3: #{_mlp_forward.1} parent=1 // pred_check_branch
      %12 = sbr.rel (0) target = $region5
    $region4: #{_mlp_forward.1} parent=1 // pred_region
      _
    $region5: #{_mlp_forward.1} parent=1 // pred_fallthru
      _
    // Predicated region
    $region6: #{_mlp_forward.1} parent=1 // pred_check
      _
    $region7: #{_mlp_forward.1} parent=1 // pred_check_branch
      %14 = sbr.rel (0) target = $region9
    $region8: #{_mlp_forward.1} parent=1 // pred_region
      %s16 = ssub.s32 256, 256
      %17 = vsyncadd [#allocation3], %s16
      %s18 = sshll.u32 [#allocation2], 4
      %s19 = int_to_ptr.vmem [resolvable:$true] %s18
      %24 = dma.hbm_to_vmem [thread:$0]  %s1, 256, %s19, [#allocation3], 64, 64, 4
    $region9: #{_mlp_forward.1} parent=1 // pred_fallthru
      _
    // Predicated region
    $region10: #{_mlp_forward.1} parent=1 // pred_check
      _
    $region11: #{_mlp_forward.1} parent=1 // pred_check_branch
      %26 = sbr.rel (0) target = $region13
    $region12: #{_mlp_forward.1} parent=1 // pred_region
      _
    $region13: #{_mlp_forward.1} parent=1 // pred_fallthru
      _
    // Predicated region
    $region14: #{_mlp_forward.1} parent=1 // pred_check
      _
    $region15: #{_mlp_forward.1} parent=1 // pred_check_branch
      %28 = sbr.rel (0) target = $region17
    $region16: #{_mlp_forward.1} parent=1 // pred_region
      _
    $region17: #{_mlp_forward.1} parent=1 // pred_fallthru
      _
    // Predicated region
    $region18: #{_mlp_forward.1} parent=1 // pred_check
      _
    $region19: #{_mlp_forward.1} parent=1 // pred_check_branch
      %30 = sbr.rel (0) target = $region21
    $region20: #{_mlp_forward.1} parent=1 // pred_region
      %31 = dma.done [#allocation3], 256
    $region21: #{_mlp_forward.1} parent=1 // pred_fallthru
      _
    %v33 = vld [vmem:[%s0] sm:$0x3]
    %v34 = vld [vmem:[#allocation2] sm:$0xf]
    %v35 = vld [vmem:[#allocation2 + $0x4] sm:$0xf]
    %v36 = vld [vmem:[#allocation2 + $0x8] sm:$0xf]
    %v37 = vld [vmem:[#allocation2 + $0xc] sm:$0xf]
    %v42 = vunpack.c.l.b16 %v34
    %v43 = vunpack.c.l.b16 %v35
    %v44 = vunpack.c.l.b16 %v36
    %v45 = vunpack.c.l.b16 %v37
    %v46 = vpack.c.b16 %v43, %v42
    %v47 = vpack.c.b16 %v45, %v44
    %vm50 = vcmask 261120
    %v52 = vsel %vm50, %v33, 0
    %54 = vmatprep.subr.bf16.mxu0 0
    %55 = vmatpush1.bf16.msra.mxu0 0
    %56 = vmatprep.subr.bf16.mxu0 0
    %57 = vmatpush1.bf16.msra.mxu0 0
    %58 = vmatprep.subr.bf16.mxu0 0
    %59 = vmatpush1.bf16.msra.mxu0 0
    %60 = vmatprep.subr.bf16.mxu0 0
    %61 = vmatpush1.bf16.msra.mxu0 0
    %62 = vmatprep.subr.bf16.mxu0 0
    %63 = vmatpush1.bf16.msra.mxu0 0
    %64 = vmatprep.subr.bf16.mxu0 0
    %65 = vmatpush1.bf16.msra.mxu0 0
    %66 = vmatprep.subr.bf16.mxu0 0
    %67 = vmatpush1.bf16.msra.mxu0 %v47
    %68 = vmatprep.subr.bf16.mxu0 0
    %69 = vmatpush1.bf16.msra.mxu0 %v46
    %70 = vmatprep.subr.bf16.mxu0 0
    %71 = vmatpush2.bf16.msra.mxu0 0
    %72 = vmatprep.subr.bf16.mxu0 0
    %73 = vmatpush2.bf16.msra.mxu0 0
    %74 = vmatprep.subr.bf16.mxu0 0
    %75 = vmatpush2.bf16.msra.mxu0 0
    %76 = vmatprep.subr.bf16.mxu0 0
    %77 = vmatpush2.bf16.msra.mxu0 0
    %78 = vmatprep.subr.bf16.mxu0 0
    %79 = vmatpush2.bf16.msra.mxu0 0
    %80 = vmatprep.subr.bf16.mxu0 0
    %81 = vmatpush2.bf16.msra.mxu0 0
    %82 = vmatprep.subr.bf16.mxu0 0
    %83 = vmatpush2.bf16.msra.mxu0 0
    %84 = vmatprep.subr.bf16.mxu0 0
    %85 = vmatpush2.bf16.msra.mxu0 0
    %86 = vmatprep.mubr.bf16.mxu0 0
    %87 = vmatmul.mubr.bf16.gmra.mxu0 %v52
    %v88 = vpop.f32.mrf.mxu0
    %v89 = vadd.f32 0.0, %v88
    %v90 = vpop.f32.mrf.mxu0
    %v91 = vpop.f32.mrf.mxu0
    %v92 = vpop.f32.mrf.mxu0
    %93 = vdwg.mxu0
    %v94 = vtanh.pop %v89
    %v95 = vpack.c.bf16 %v94, %v94
    %v96 = vld [vmem:[%s2] sm:$0xf]
    %v97 = vld [vmem:[%s2 + $0x4] sm:$0xf]
    %v98 = vld [vmem:[%s2 + $0x8] sm:$0xf]
    %v99 = vld [vmem:[%s2 + $0xc] sm:$0xf]
    %v100 = vld [vmem:[%s2 + $0x10] sm:$0xf]
    %v101 = vld [vmem:[%s2 + $0x14] sm:$0xf]
    %v102 = vld [vmem:[%s2 + $0x18] sm:$0xf]
    %v103 = vld [vmem:[%s2 + $0x1c] sm:$0xf]
    %v104 = vld [vmem:[%s2 + $0x20] sm:$0xf]
    %v105 = vld [vmem:[%s2 + $0x24] sm:$0xf]
    %v106 = vld [vmem:[%s2 + $0x28] sm:$0xf]
    %v107 = vld [vmem:[%s2 + $0x2c] sm:$0xf]
    %v108 = vld [vmem:[%s2 + $0x30] sm:$0xf]
    %v109 = vld [vmem:[%s2 + $0x34] sm:$0xf]
    %v110 = vld [vmem:[%s2 + $0x38] sm:$0xf]
    %v111 = vld [vmem:[%s2 + $0x3c] sm:$0xf]
    %v128 = vunpack.c.l.b16 %v96
    %v129 = vunpack.c.l.b16 %v97
    %v130 = vunpack.c.l.b16 %v98
    %v131 = vunpack.c.l.b16 %v99
    %v132 = vunpack.c.l.b16 %v100
    %v133 = vunpack.c.l.b16 %v101
    %v134 = vunpack.c.l.b16 %v102
    %v135 = vunpack.c.l.b16 %v103
    %v136 = vunpack.c.l.b16 %v104
    %v137 = vunpack.c.l.b16 %v105
    %v138 = vunpack.c.l.b16 %v106
    %v139 = vunpack.c.l.b16 %v107
    %v140 = vunpack.c.l.b16 %v108
    %v141 = vunpack.c.l.b16 %v109
    %v142 = vunpack.c.l.b16 %v110
    %v143 = vunpack.c.l.b16 %v111
    %v144 = vpack.c.b16 %v129, %v128
    %v145 = vpack.c.b16 %v131, %v130
    %v146 = vpack.c.b16 %v133, %v132
    %v147 = vpack.c.b16 %v135, %v134
    %v148 = vpack.c.b16 %v137, %v136
    %v149 = vpack.c.b16 %v139, %v138
    %v150 = vpack.c.b16 %v141, %v140
    %v151 = vpack.c.b16 %v143, %v142
    %160 = vmatprep.subr.bf16.mxu0 0
    %161 = vmatpush1.bf16.msra.mxu0 %v151
    %162 = vmatprep.subr.bf16.mxu0 0
    %163 = vmatpush1.bf16.msra.mxu0 %v150
    %164 = vmatprep.subr.bf16.mxu0 0
    %165 = vmatpush1.bf16.msra.mxu0 %v149
    %166 = vmatprep.subr.bf16.mxu0 0
    %167 = vmatpush1.bf16.msra.mxu0 %v148
    %168 = vmatprep.subr.bf16.mxu0 0
    %169 = vmatpush1.bf16.msra.mxu0 %v147
    %170 = vmatprep.subr.bf16.mxu0 0
    %171 = vmatpush1.bf16.msra.mxu0 %v146
    %172 = vmatprep.subr.bf16.mxu0 0
    %173 = vmatpush1.bf16.msra.mxu0 %v145
    %174 = vmatprep.subr.bf16.mxu0 0
    %175 = vmatpush1.bf16.msra.mxu0 %v144
    %176 = vmatprep.subr.bf16.mxu0 0
    %177 = vmatpush2.bf16.msra.mxu0 0
    %178 = vmatprep.subr.bf16.mxu0 0
    %179 = vmatpush2.bf16.msra.mxu0 0
    %180 = vmatprep.subr.bf16.mxu0 0
    %181 = vmatpush2.bf16.msra.mxu0 0
    %182 = vmatprep.subr.bf16.mxu0 0
    %183 = vmatpush2.bf16.msra.mxu0 0
    %184 = vmatprep.subr.bf16.mxu0 0
    %185 = vmatpush2.bf16.msra.mxu0 0
    %186 = vmatprep.subr.bf16.mxu0 0
    %187 = vmatpush2.bf16.msra.mxu0 0
    %188 = vmatprep.subr.bf16.mxu0 0
    %189 = vmatpush2.bf16.msra.mxu0 0
    %190 = vmatprep.subr.bf16.mxu0 0
    %191 = vmatpush2.bf16.msra.mxu0 0
    %192 = vmatprep.mubr.bf16.mxu0 0
    %193 = vmatmul.mubr.bf16.gmra.mxu0 %v95
    %v194 = vpop.f32.mrf.mxu0
    %v195 = vadd.f32 0.0, %v194
    %v196 = vpop.f32.mrf.mxu0
    %v197 = vpop.f32.mrf.mxu0
    %v198 = vpop.f32.mrf.mxu0
    %199 = vdwg.mxu0
    %v200 = vtanh.pop %v195
    %v201 = vpack.c.bf16 %v200, %v200
    %v202 = vld [vmem:[%s3] sm:$0xf]
    %v203 = vld [vmem:[%s3 + $0x4] sm:$0xf]
    %v204 = vld [vmem:[%s3 + $0x8] sm:$0xf]
    %v205 = vld [vmem:[%s3 + $0xc] sm:$0xf]
    %v206 = vld [vmem:[%s3 + $0x10] sm:$0xf]
    %v207 = vld [vmem:[%s3 + $0x14] sm:$0xf]
    %v208 = vld [vmem:[%s3 + $0x18] sm:$0xf]
    %v209 = vld [vmem:[%s3 + $0x1c] sm:$0xf]
    %v210 = vld [vmem:[%s3 + $0x20] sm:$0xf]
    %v211 = vld [vmem:[%s3 + $0x24] sm:$0xf]
    %v212 = vld [vmem:[%s3 + $0x28] sm:$0xf]
    %v213 = vld [vmem:[%s3 + $0x2c] sm:$0xf]
    %v214 = vld [vmem:[%s3 + $0x30] sm:$0xf]
    %v215 = vld [vmem:[%s3 + $0x34] sm:$0xf]
    %v216 = vld [vmem:[%s3 + $0x38] sm:$0xf]
    %v217 = vld [vmem:[%s3 + $0x3c] sm:$0xf]
    %v234 = vunpack.c.l.b16 %v202
    %v235 = vunpack.c.l.b16 %v203
    %v236 = vunpack.c.l.b16 %v204
    %v237 = vunpack.c.l.b16 %v205
    %v238 = vunpack.c.l.b16 %v206
    %v239 = vunpack.c.l.b16 %v207
    %v240 = vunpack.c.l.b16 %v208
    %v241 = vunpack.c.l.b16 %v209
    %v242 = vunpack.c.l.b16 %v210
    %v243 = vunpack.c.l.b16 %v211
    %v244 = vunpack.c.l.b16 %v212
    %v245 = vunpack.c.l.b16 %v213
    %v246 = vunpack.c.l.b16 %v214
    %v247 = vunpack.c.l.b16 %v215
    %v248 = vunpack.c.l.b16 %v216
    %v249 = vunpack.c.l.b16 %v217
    %v250 = vpack.c.b16 %v235, %v234
    %v251 = vpack.c.b16 %v237, %v236
    %v252 = vpack.c.b16 %v239, %v238
    %v253 = vpack.c.b16 %v241, %v240
    %v254 = vpack.c.b16 %v243, %v242
    %v255 = vpack.c.b16 %v245, %v244
    %v256 = vpack.c.b16 %v247, %v246
    %v257 = vpack.c.b16 %v249, %v248
    %266 = vmatprep.subr.bf16.mxu0 0
    %267 = vmatpush1.bf16.msra.mxu0 %v257
    %268 = vmatprep.subr.bf16.mxu0 0
    %269 = vmatpush1.bf16.msra.mxu0 %v256
    %270 = vmatprep.subr.bf16.mxu0 0
    %271 = vmatpush1.bf16.msra.mxu0 %v255
    %272 = vmatprep.subr.bf16.mxu0 0
    %273 = vmatpush1.bf16.msra.mxu0 %v254
    %274 = vmatprep.subr.bf16.mxu0 0
    %275 = vmatpush1.bf16.msra.mxu0 %v253
    %276 = vmatprep.subr.bf16.mxu0 0
    %277 = vmatpush1.bf16.msra.mxu0 %v252
    %278 = vmatprep.subr.bf16.mxu0 0
    %279 = vmatpush1.bf16.msra.mxu0 %v251
    %280 = vmatprep.subr.bf16.mxu0 0
    %281 = vmatpush1.bf16.msra.mxu0 %v250
    %282 = vmatprep.subr.bf16.mxu0 0
    %283 = vmatpush2.bf16.msra.mxu0 0
    %284 = vmatprep.subr.bf16.mxu0 0
    %285 = vmatpush2.bf16.msra.mxu0 0
    %286 = vmatprep.subr.bf16.mxu0 0
    %287 = vmatpush2.bf16.msra.mxu0 0
    %288 = vmatprep.subr.bf16.mxu0 0
    %289 = vmatpush2.bf16.msra.mxu0 0
    %290 = vmatprep.subr.bf16.mxu0 0
    %291 = vmatpush2.bf16.msra.mxu0 0
    %292 = vmatprep.subr.bf16.mxu0 0
    %293 = vmatpush2.bf16.msra.mxu0 0
    %294 = vmatprep.subr.bf16.mxu0 0
    %295 = vmatpush2.bf16.msra.mxu0 0
    %296 = vmatprep.subr.bf16.mxu0 0
    %297 = vmatpush2.bf16.msra.mxu0 0
    %298 = vmatprep.mubr.bf16.mxu0 0
    %299 = vmatmul.mubr.bf16.gmra.mxu0 %v201
    %v300 = vpop.f32.mrf.mxu0
    %v301 = vadd.f32 0.0, %v300
    %v302 = vpop.f32.mrf.mxu0
    %v303 = vpop.f32.mrf.mxu0
    %v304 = vpop.f32.mrf.mxu0
    %305 = vdwg.mxu0
    %vm306 = vcmask 60416
    %307 = vst.msk [vmem:[#allocation5] sm:$0xf] %vm306, %v301
    // Predicated region
    $region22: #{_mlp_forward.1} parent=1 // pred_check
      _
    $region23: #{_mlp_forward.1} parent=1 // pred_check_branch
      %309 = sbr.rel (0) target = $region25
    $region24: #{_mlp_forward.1} parent=1 // pred_region
      %s311 = ssub.s32 64, 64
      %312 = vsyncadd [#allocation4], %s311
      %s314 = sshll.u32 [#allocation5], 4
      %s315 = int_to_ptr.vmem [resolvable:$true] %s314
      %317 = dma.vmem_to_hbm [thread:$0]  %s315, 64, %s4, [#allocation4]
    $region25: #{_mlp_forward.1} parent=1 // pred_fallthru
      _
    // Predicated region
    $region26: #{_mlp_forward.1} parent=1 // pred_check
      _
    $region27: #{_mlp_forward.1} parent=1 // pred_check_branch
      %319 = sbr.rel (0) target = $region29
    $region28: #{_mlp_forward.1} parent=1 // pred_region
      %320 = dma.done [#allocation4], 64
    $region29: #{_mlp_forward.1} parent=1 // pred_fallthru
      _
    %321 = vsyncpa [#allocation3], 1
    %322 = vsyncpa [#allocation4], 1

</llo_original>
